<compile_context>
chip_gen: v5e
topology: v5e:2x2
jax: 0.10.0
libtpu: 0.0.40
codegen_flags: <defaults>
</compile_context>

<pallas_src>
import jax
import jax.numpy as jnp
from jax.experimental import pallas as pl
from jax.experimental.pallas import tpu as pltpu

NUM_CLASSES = 5
FEAT_E = 32            # stand-in for efficientnet_b4.classifier[1].in_features (=1792)
FEAT_R = 32            # stand-in for resnet.fc.in_features (=2048)
COUT = FEAT_E + FEAT_R
COUT_PAD = 128         # feature rows zero-padded to a full sublane tile
NC_PAD = 128           # lane-dense logits width; sliced back to NUM_CLASSES in wrapper


# ---------------------------------------------------------------------------
# Single fused kernel, one grid step = B images:
#   feat_T  = [W_conv_e | W_conv_r | bias]^T @ patches_T        (MXU, f32 acc)
#   act_T   = SiLU(feat) on rows [0:FEAT_E), ReLU elsewhere     (VPU/EUP)
#   pooled  = mean_{HW}(act_T)   per image                      (XLU lane reduce)
#   logits  = pooled . (0.5*[W_head_e; W_head_r]) + 0.5*(b_e+b_r)  (VPU + reduce)
# (Dropout before the EfficientNet classifier is identity in eval mode.)
# ---------------------------------------------------------------------------
def fused_ensemble_kernel(p_ref, wc_ref, wh_ref, bh_ref, o_ref):
    # p_ref : (1, K_PAD, B*HW) bf16  -- im2col patches^T, ones bias row, zero pad rows
    # wc_ref: (COUT_PAD, K_PAD) bf16 -- fused conv weights^T with conv bias folded in
    # wh_ref: (COUT_PAD, NC_PAD) f32 -- 0.5*[We; Wr], zero-padded rows/cols
    # bh_ref: (1, NC_PAD) f32        -- 0.5*(be + br), lane-padded
    # o_ref : (1, B, NC_PAD) f32
    B = o_ref.shape[1]
    HW = p_ref.shape[2] // B

    # Both conv stems (+bias) as one MXU GEMM; fully dense (128 x B*HW) output.
    feat = jnp.dot(wc_ref[...], p_ref[0],
                   preferred_element_type=jnp.float32)            # (COUT_PAD, B*HW)

    # Branch-specific activation selected by feature-row (sublane) index.
    # Rows [0:FEAT_E): EfficientNet stem -> SiLU; [FEAT_E:COUT): ResNet stem ->
    # ReLU; padded rows are exactly zero and stay zero.
    row = jax.lax.broadcasted_iota(jnp.int32, feat.shape, 0)
    act = jnp.where(row < FEAT_E,
                    feat * jax.nn.sigmoid(feat),                  # SiLU
                    jnp.maximum(feat, 0.0))                       # ReLU

    # Global average pool per image BEFORE the head (linear ops commute), then
    # the tiny head as a lane-broadcast multiply + sublane reduce. All static
    # slices are lane-aligned (HW is a multiple of 128).
    inv_hw = 1.0 / HW
    rows = []
    for b in range(B):                                            # static unroll
        pooled = jnp.sum(act[:, b * HW:(b + 1) * HW],
                         axis=1, keepdims=True) * inv_hw          # (COUT_PAD, 1)
        rows.append(jnp.sum(pooled * wh_ref[...],
                            axis=0, keepdims=True))               # (1, NC_PAD)
    logits = rows[0] if B == 1 else jnp.concatenate(rows, axis=0)  # (B, NC_PAD)

    o_ref[...] = (logits + bh_ref[...]).reshape(1, B, o_ref.shape[2])


def fused_ensemble_call(patches_t, wc_t, wh, bh, *, images_per_step):
    G, K_PAD, BHW = patches_t.shape
    B = images_per_step
    return pl.pallas_call(
        fused_ensemble_kernel,
        out_shape=jax.ShapeDtypeStruct((G, B, NC_PAD), jnp.float32),
        grid=(G,),
        in_specs=[
            pl.BlockSpec((1, K_PAD, BHW), lambda g: (g, 0, 0)),
            pl.BlockSpec((COUT_PAD, K_PAD), lambda g: (0, 0)),
            pl.BlockSpec((COUT_PAD, NC_PAD), lambda g: (0, 0)),
            pl.BlockSpec((1, NC_PAD), lambda g: (0, 0)),
        ],
        out_specs=pl.BlockSpec((1, B, NC_PAD), lambda g: (g, 0, 0)),
        compiler_params=pltpu.CompilerParams(
            dimension_semantics=("parallel",)),
    )(patches_t, wc_t, wh, bh)


# ---------------------------------------------------------------------------
# Wrapper glue: im2col (transposed, bias-row augmented), parameter fusion.
# ---------------------------------------------------------------------------
def _round_up(v, m):
    return ((v + m - 1) // m) * m


def _images_per_step(n):
    """Largest B in {8,4,2} dividing n while keeping grid >= 2 (v7x: 2 TCs)."""
    for b in (8, 4, 2):
        if n % b == 0 and n // b >= 2:
            return b
    return 1


def _im2col_t(x_nhwc, k_pad):
    """3x3 / stride-1 / pad-1 patches, transposed and bias-augmented:
       (N, H, W, Cin) -> (N, k_pad, H*W); row 9*Cin is all ones (conv-bias row),
       remaining pad rows are zero."""
    N, H, W, Cin = x_nhwc.shape
    xp = jnp.pad(x_nhwc, ((0, 0), (1, 1), (1, 1), (0, 0)))
    taps = [xp[:, dh:dh + H, dw:dw + W, :] for dh in range(3) for dw in range(3)]
    p = jnp.concatenate(taps, axis=-1).reshape(N, H * W, 9 * Cin)
    p = jnp.transpose(p, (0, 2, 1))                                # (N, 9*Cin, HW)
    ones = jnp.ones((N, 1, H * W), p.dtype)
    pad = jnp.zeros((N, k_pad - 9 * Cin - 1, H * W), p.dtype)
    return jnp.concatenate([p, ones, pad], axis=1)                 # (N, k_pad, HW)


def init_params(key, cin=3):
    ks = jax.random.split(key, 8)
    s = 0.1
    return {
        "conv_e_w": s * jax.random.normal(ks[0], (3, 3, cin, FEAT_E), jnp.float32),
        "conv_e_b": s * jax.random.normal(ks[1], (1, FEAT_E), jnp.float32),
        "conv_r_w": s * jax.random.normal(ks[2], (3, 3, cin, FEAT_R), jnp.float32),
        "conv_r_b": s * jax.random.normal(ks[3], (1, FEAT_R), jnp.float32),
        "head_e_w": s * jax.random.normal(ks[4], (FEAT_E, NUM_CLASSES), jnp.float32),
        "head_e_b": s * jax.random.normal(ks[5], (1, NUM_CLASSES), jnp.float32),
        "head_r_w": s * jax.random.normal(ks[6], (FEAT_R, NUM_CLASSES), jnp.float32),
        "head_r_b": s * jax.random.normal(ks[7], (1, NUM_CLASSES), jnp.float32),
    }


@jax.jit
def ensemble_forward(params, x_nchw):
    # NCHW -> NHWC; im2col (transposed, lane-dense) so both conv stems become
    # one GEMM inside the kernel.
    x = jnp.transpose(x_nchw, (0, 2, 3, 1)).astype(jnp.float32)
    N, H, W, Cin = x.shape
    HW = H * W
    K = 9 * Cin
    K_PAD = _round_up(K + 1, 32)                                   # +1 bias row

    patches_t = _im2col_t(x, K_PAD).astype(jnp.bfloat16)           # (N, K_PAD, HW)

    # Fused conv weights (both branches along Cout, zero-padded to 128) with the
    # conv bias folded in as an extra K row (matching the patches' ones-row).
    wc = jnp.concatenate([params["conv_e_w"], params["conv_r_w"]], axis=-1)
    wc = wc.reshape(K, COUT)
    bc = jnp.concatenate([params["conv_e_b"], params["conv_r_b"]], axis=-1)
    wc_aug = jnp.zeros((K_PAD, COUT_PAD), jnp.float32)
    wc_aug = wc_aug.at[:K, :COUT].set(wc)
    wc_aug = wc_aug.at[K, :COUT].set(bc[0])
    wc_t = wc_aug.T.astype(jnp.bfloat16)                           # (COUT_PAD, K_PAD)

    # Combined head: pooled . [We; Wr] + (be + br) == logits_e + logits_r, with
    # the 0.5 ensemble average folded in; zero-padded to (128, 128) / (1, 128).
    wh_small = 0.5 * jnp.concatenate([params["head_e_w"], params["head_r_w"]], axis=0)
    wh = jnp.zeros((COUT_PAD, NC_PAD), jnp.float32).at[:COUT, :NUM_CLASSES].set(wh_small)
    bh = 0.5 * (params["head_e_b"] + params["head_r_b"])
    bh = jnp.pad(bh, ((0, 0), (0, NC_PAD - NUM_CLASSES)))

    # Group B images per grid step (concatenated along the lane/HW axis).
    B = _images_per_step(N)
    G = N // B
    if B > 1:
        patches_t = (patches_t.reshape(G, B, K_PAD, HW)
                     .transpose(0, 2, 1, 3)
                     .reshape(G, K_PAD, B * HW))
    else:
        patches_t = patches_t.reshape(G, K_PAD, HW)

    out = fused_ensemble_call(patches_t, wc_t, wh, bh, images_per_step=B)
    return out.reshape(N, NC_PAD)[:, :NUM_CLASSES]                 # (N, 5) logits


# Pure-JAX reference (f32) of the same stand-in forward, for a sanity check.
def reference_forward(params, x_nchw):
    x = jnp.transpose(x_nchw, (0, 2, 3, 1)).astype(jnp.float32)
    N, H, W, Cin = x.shape
    xp = jnp.pad(x, ((0, 0), (1, 1), (1, 1), (0, 0)))
    taps = [xp[:, dh:dh + H, dw:dw + W, :] for dh in range(3) for dw in range(3)]
    patches = jnp.concatenate(taps, axis=-1).reshape(N, H * W, 9 * Cin)
    fe = patches @ params["conv_e_w"].reshape(9 * Cin, FEAT_E) + params["conv_e_b"]
    fr = patches @ params["conv_r_w"].reshape(9 * Cin, FEAT_R) + params["conv_r_b"]
    fe = fe * jax.nn.sigmoid(fe)
    fr = jnp.maximum(fr, 0.0)
    le = fe.mean(axis=1) @ params["head_e_w"] + params["head_e_b"]
    lr = fr.mean(axis=1) @ params["head_r_w"] + params["head_r_b"]
    return (le + lr) * 0.5


if __name__ == "__main__":
    key = jax.random.PRNGKey(0)
    k_x, k_p = jax.random.split(key)
    x = jax.random.normal(k_x, (2, 3, 16, 16), jnp.float32)   # NCHW like PyTorch
    params = init_params(k_p, cin=3)

    out = ensemble_forward(params, x)
    out = jax.block_until_ready(out)

    ref = reference_forward(params, x)
    assert out.shape == (2, NUM_CLASSES), out.shape
    assert jnp.all(jnp.isfinite(out))
    assert jnp.allclose(out, ref, atol=2e-2, rtol=2e-2), float(jnp.max(jnp.abs(out - ref)))
    print("KERNEL_OK")
</pallas_src>

<mosaic_0001>
module attributes {stable_mosaic.version = 11 : i64} {
  func.func @fused_ensemble_kernel(%arg0: i32, %arg1: memref<1x32x256xbf16, #tpu.memory_space<vmem>>, %arg2: memref<128x32xbf16, #tpu.memory_space<vmem>>, %arg3: memref<128x128xf32, #tpu.memory_space<vmem>>, %arg4: memref<1x128xf32, #tpu.memory_space<vmem>>, %arg5: memref<1x1x128xf32, #tpu.memory_space<vmem>>) attributes {dimension_semantics = [#tpu.dimension_semantics<parallel>], iteration_bounds = array<i64: 2>, scalar_prefetch = 0 : i64, scratch_operands = 0 : i64, tpu.core_type = #tpu.core_type<tc>, window_params = [{transform_indices = @transform_0, window_bounds = array<i64: 1, 32, 256>}, {pipeline_mode = #tpu.pipeline_mode<synchronous>, transform_indices = @transform_1, window_bounds = array<i64: 128, 32>}, {pipeline_mode = #tpu.pipeline_mode<synchronous>, transform_indices = @transform_2, window_bounds = array<i64: 128, 128>}, {pipeline_mode = #tpu.pipeline_mode<synchronous>, transform_indices = @transform_3, window_bounds = array<i64: 1, 128>}, {transform_indices = @transform_4, window_bounds = array<i64: 1, 1, 128>}]} {
    %c0 = arith.constant 0 : index
    %c0_0 = arith.constant 0 : index
    %0 = vector.load %arg2[%c0, %c0_0] : memref<128x32xbf16, #tpu.memory_space<vmem>>, vector<128x32xbf16>
    %c0_1 = arith.constant 0 : index
    %c0_2 = arith.constant 0 : index
    %c0_3 = arith.constant 0 : index
    %1 = vector.load %arg1[%c0_1, %c0_2, %c0_3] : memref<1x32x256xbf16, #tpu.memory_space<vmem>>, vector<1x32x256xbf16>
    %2 = vector.shape_cast %1 : vector<1x32x256xbf16> to vector<32x256xbf16>
    %cst = arith.constant dense<0.000000e+00> : vector<128x256xf32>
    %3 = tpu.matmul %0, %2, %cst {dimension_numbers = #tpu.dot_dimension_numbers<[1], [0], [0], [1], [0, 0, 1, 1], [], []>} : vector<128x32xbf16>, vector<32x256xbf16>, vector<128x256xf32> -> vector<128x256xf32>
    %4 = tpu.iota {dimensions = array<i32: 0>} : vector<128x256xi32>
    %c32_i32 = arith.constant 32 : i32
    %5 = vector.broadcast %c32_i32 : i32 to vector<128x256xi32>
    %6 = arith.cmpi slt, %4, %5 : vector<128x256xi32>
    %7 = arith.negf %3 : vector<128x256xf32>
    %8 = math.exp %7 : vector<128x256xf32>
    %cst_4 = arith.constant 1.000000e+00 : f32
    %9 = vector.broadcast %cst_4 : f32 to vector<128x256xf32>
    %10 = arith.addf %9, %8 : vector<128x256xf32>
    %11 = arith.divf %9, %10 : vector<128x256xf32>
    %12 = arith.mulf %3, %11 : vector<128x256xf32>
    %cst_5 = arith.constant 0.000000e+00 : f32
    %13 = vector.broadcast %cst_5 : f32 to vector<128x256xf32>
    %14 = arith.maximumf %3, %13 : vector<128x256xf32>
    %15 = arith.select %6, %12, %14 : vector<128x256xi1>, vector<128x256xf32>
    %cst_6 = arith.constant dense<0.000000e+00> : vector<128xf32>
    %16 = vector.multi_reduction <add>, %15, %cst_6 [1] : vector<128x256xf32> to vector<128xf32>
    %17 = vector.shape_cast %16 : vector<128xf32> to vector<128x1xf32>
    %cst_7 = arith.constant 3.906250e-03 : f32
    %18 = vector.broadcast %cst_7 : f32 to vector<128x1xf32>
    %19 = arith.mulf %17, %18 : vector<128x1xf32>
    %c0_8 = arith.constant 0 : index
    %c0_9 = arith.constant 0 : index
    %20 = vector.load %arg3[%c0_8, %c0_9] : memref<128x128xf32, #tpu.memory_space<vmem>>, vector<128x128xf32>
    %21 = vector.broadcast %19 : vector<128x1xf32> to vector<128x128xf32>
    %22 = arith.mulf %21, %20 : vector<128x128xf32>
    %cst_10 = arith.constant dense<0.000000e+00> : vector<128xf32>
    %23 = vector.multi_reduction <add>, %22, %cst_10 [0] : vector<128x128xf32> to vector<128xf32>
    %24 = vector.shape_cast %23 : vector<128xf32> to vector<1x128xf32>
    %c0_11 = arith.constant 0 : index
    %c0_12 = arith.constant 0 : index
    %25 = vector.load %arg4[%c0_11, %c0_12] : memref<1x128xf32, #tpu.memory_space<vmem>>, vector<1x128xf32>
    %26 = arith.addf %24, %25 : vector<1x128xf32>
    %27 = vector.shape_cast %26 : vector<1x128xf32> to vector<1x1x128xf32>
    %c0_13 = arith.constant 0 : index
    %c0_14 = arith.constant 0 : index
    %c0_15 = arith.constant 0 : index
    %28 = vector.load %arg5[%c0_13, %c0_14, %c0_15] : memref<1x1x128xf32, #tpu.memory_space<vmem>>, vector<1x1x128xf32>
    tpu.vector_store %arg5[%c0_13, %c0_14, %c0_15], %27 {strides = array<i32>} : memref<1x1x128xf32, #tpu.memory_space<vmem>>, vector<1x1x128xf32>,
    return
  }
  func.func @transform_0(%arg0: i32) -> (i32, i32, i32) {
    %c0_i32 = arith.constant 0 : i32
    %c0_i32_0 = arith.constant 0 : i32
    %c0_i32_1 = arith.constant 0 : i32
    return %arg0, %c0_i32, %c0_i32_0 : i32, i32, i32
  }
  func.func @transform_1(%arg0: i32) -> (i32, i32) {
    %c0_i32 = arith.constant 0 : i32
    %c0_i32_0 = arith.constant 0 : i32
    %c0_i32_1 = arith.constant 0 : i32
    return %c0_i32, %c0_i32_0 : i32, i32
  }
  func.func @transform_2(%arg0: i32) -> (i32, i32) {
    %c0_i32 = arith.constant 0 : i32
    %c0_i32_0 = arith.constant 0 : i32
    %c0_i32_1 = arith.constant 0 : i32
    return %c0_i32, %c0_i32_0 : i32, i32
  }
  func.func @transform_3(%arg0: i32) -> (i32, i32) {
    %c0_i32 = arith.constant 0 : i32
    %c0_i32_0 = arith.constant 0 : i32
    %c0_i32_1 = arith.constant 0 : i32
    return %c0_i32, %c0_i32_0 : i32, i32
  }
  func.func @transform_4(%arg0: i32) -> (i32, i32, i32) {
    %c0_i32 = arith.constant 0 : i32
    %c0_i32_0 = arith.constant 0 : i32
    %c0_i32_1 = arith.constant 0 : i32
    return %arg0, %c0_i32, %c0_i32_0 : i32, i32, i32
  }
}

</mosaic_0001>

<llo_original>
// kernel: ensemble_forward.1
$region0: #{ensemble_forward.1}
  #allocation0 [shape = 'u32[]', space=smem, size = 0x4, offset = 0x4, fixed_abs, tag = 'smem constant byte address 0x4 - core index']
  #allocation1 [shape = 'u32[72,128]{1,0:T(1,128)}', space=vmem, size = 0x9000, scoped, tag = 'internal scratch']
  %s0 = inlined_call_operand.vmem [shape: bf16[2,32,256], index: 0, kind: input, shape index: {}]
  %s1 = inlined_call_operand.vmem [shape: bf16[128,32], index: 1, kind: input, shape index: {}]
  %s2 = inlined_call_operand.vmem [shape: f32[128,128], index: 2, kind: input, shape index: {}]
  %s3 = inlined_call_operand.vmem [shape: f32[1,128], index: 3, kind: input, shape index: {}]
  %s4 = inlined_call_operand.hbm [shape: f32[2,1,128], index: 4, kind: output, shape index: {}]
  %s5 = sld [smem:[#allocation0]]
  $region49: #{ensemble_forward.1} parent=0
    _
  %s7 = ssub.s32 1, %s5
  %s8 = scalar_select 0, %s7, %s5
  $region1: #{ensemble_forward.1} parent=0
    #allocation2 [shape = 'u8[1024]{0}', space=vmem, size = 0x400, scoped, tag = 'output window, operand 0']
    #allocation3 [shape = 's32[2]{0}', space=sflag, size = 0x8, scoped, tag = 'scoped memory for ensemble_forward.1']
    %9 = vsyncpa [#allocation3], 0
    %s10 = scalar_lea.sflag [#allocation3], 1
    %11 = vsyncpa %s10, 0
    loop: start=0, step=1, limit=4
    $region2: #{ensemble_forward.1} parent=1 // loop_pre_header
      _
    $region3: #{ensemble_forward.1} parent=1 // loop_header
      %s13 = sphi 0, %s17
      %p14 = scmp.ge.s32.totalorder %s13, 4
      %s23 = sphi 0, %s25
      %s26 = sphi 0, %s23
      %s27 = sphi 0, %s26
      %s43 = sphi 0, %s27
      %s47 = sphi 0, %s47
      %s49 = sphi 0, %s47
      %s50 = sphi 0, %s49
      %s64 = sphi 0, %s50
      %s68 = sphi 0, %s68
      %s70 = sphi 0, %s68
      %s71 = sphi 0, %s70
      %s85 = sphi 0, %s71
      %s89 = sphi 0, %s89
      %s91 = sphi 0, %s89
      %s92 = sphi 0, %s91
      %s106 = sphi 0, %s92
      %s112 = sphi 0, %s114
      %s115 = sphi 0, %s112
      %s116 = sphi 0, %s115
      %s132 = sphi 0, %s116
    $region4: #{ensemble_forward.1} parent=1 // loop_header_branch
      %16 = sbr.rel (%p14) target = $region8
    $region5: #{ensemble_forward.1} parent=1 // loop_body
      %s18 = ssub.s32 %s13, 1
      %s19 = ssub.s32 %s13, 2
      %s20 = sadd.s32 %s13, 1
      %s21 = ssub.s32 %s13, %s20
      %p22 = scmp.eq.s32.totalorder %s21, 0
      %s24 = sadd.s32 %s23, 1
      %s25 = scalar_select %p22, %s23, %s24
      %p28 = pneg %p22
      %p29 = scmp.eq.s32.totalorder %s13, 1
      %p30 = por %p28, %p29
      %p31 = scmp.ne.s32.totalorder %s23, %s26
      %p32 = scmp.eq.s32.totalorder %s13, 0
      %p33 = por %p31, %p32
      %p34 = scmp.ne.s32.totalorder %s23, %s26
      %p35 = scmp.eq.s32.totalorder %s18, 1
      %p36 = por %p34, %p35
      %p37 = scmp.ne.s32.totalorder %s26, %s27
      %p38 = scmp.eq.s32.totalorder %s18, 0
      %p39 = por %p37, %p38
      %p40 = scmp.ne.s32.totalorder %s26, %s27
      %p41 = scmp.eq.s32.totalorder %s19, 1
      %p42 = por %p40, %p41
      %p44 = scmp.ne.s32.totalorder %s27, %s43
      %p45 = scmp.eq.s32.totalorder %s19, 0
      %p46 = por %p44, %p45
      %s48 = sadd.s32 %s47, 1
      %p51 = scmp.eq.s32.totalorder %s13, 1
      %p52 = scmp.ne.s32.totalorder %s47, %s49
      %p53 = scmp.eq.s32.totalorder %s13, 0
      %p54 = por %p52, %p53
      %p55 = scmp.ne.s32.totalorder %s47, %s49
      %p56 = scmp.eq.s32.totalorder %s18, 1
      %p57 = por %p55, %p56
      %p58 = scmp.ne.s32.totalorder %s49, %s50
      %p59 = scmp.eq.s32.totalorder %s18, 0
      %p60 = por %p58, %p59
      %p61 = scmp.ne.s32.totalorder %s49, %s50
      %p62 = scmp.eq.s32.totalorder %s19, 1
      %p63 = por %p61, %p62
      %p65 = scmp.ne.s32.totalorder %s50, %s64
      %p66 = scmp.eq.s32.totalorder %s19, 0
      %p67 = por %p65, %p66
      %s69 = sadd.s32 %s68, 1
      %p72 = scmp.eq.s32.totalorder %s13, 1
      %p73 = scmp.ne.s32.totalorder %s68, %s70
      %p74 = scmp.eq.s32.totalorder %s13, 0
      %p75 = por %p73, %p74
      %p76 = scmp.ne.s32.totalorder %s68, %s70
      %p77 = scmp.eq.s32.totalorder %s18, 1
      %p78 = por %p76, %p77
      %p79 = scmp.ne.s32.totalorder %s70, %s71
      %p80 = scmp.eq.s32.totalorder %s18, 0
      %p81 = por %p79, %p80
      %p82 = scmp.ne.s32.totalorder %s70, %s71
      %p83 = scmp.eq.s32.totalorder %s19, 1
      %p84 = por %p82, %p83
      %p86 = scmp.ne.s32.totalorder %s71, %s85
      %p87 = scmp.eq.s32.totalorder %s19, 0
      %p88 = por %p86, %p87
      %s90 = sadd.s32 %s89, 1
      %p93 = scmp.eq.s32.totalorder %s13, 1
      %p94 = scmp.ne.s32.totalorder %s89, %s91
      %p95 = scmp.eq.s32.totalorder %s13, 0
      %p96 = por %p94, %p95
      %p97 = scmp.ne.s32.totalorder %s89, %s91
      %p98 = scmp.eq.s32.totalorder %s18, 1
      %p99 = por %p97, %p98
      %p100 = scmp.ne.s32.totalorder %s91, %s92
      %p101 = scmp.eq.s32.totalorder %s18, 0
      %p102 = por %p100, %p101
      %p103 = scmp.ne.s32.totalorder %s91, %s92
      %p104 = scmp.eq.s32.totalorder %s19, 1
      %p105 = por %p103, %p104
      %p107 = scmp.ne.s32.totalorder %s92, %s106
      %p108 = scmp.eq.s32.totalorder %s19, 0
      %p109 = por %p107, %p108
      %s110 = ssub.s32 %s13, %s20
      %p111 = scmp.eq.s32.totalorder %s110, 0
      %s113 = sadd.s32 %s112, 1
      %s114 = scalar_select %p111, %s112, %s113
      %p117 = pneg %p111
      %p118 = scmp.eq.s32.totalorder %s13, 1
      %p119 = por %p117, %p118
      %p120 = scmp.ne.s32.totalorder %s112, %s115
      %p121 = scmp.eq.s32.totalorder %s13, 0
      %p122 = por %p120, %p121
      %p123 = scmp.ne.s32.totalorder %s112, %s115
      %p124 = scmp.eq.s32.totalorder %s18, 1
      %p125 = por %p123, %p124
      %p126 = scmp.ne.s32.totalorder %s115, %s116
      %p127 = scmp.eq.s32.totalorder %s18, 0
      %p128 = por %p126, %p127
      %p129 = scmp.ne.s32.totalorder %s115, %s116
      %p130 = scmp.eq.s32.totalorder %s19, 1
      %p131 = por %p129, %p130
      %p133 = scmp.ne.s32.totalorder %s116, %s132
      %p134 = scmp.eq.s32.totalorder %s19, 0
      %p135 = por %p133, %p134
      %p136 = scmp.le.s32.totalorder 1, %s13
      %p137 = scmp.lt.s32.totalorder %s13, 3
      %p138 = pnand %p136, %p137
      %p139 = pneg %p138
      // Predicated region
      $region9: #{ensemble_forward.1} parent=5 // pred_check
        _
      $region10: #{ensemble_forward.1} parent=5 // pred_check_branch
        %141 = sbr.rel (%p138) target = $region12
      $region11: #{ensemble_forward.1} parent=5 // pred_region
        %s142 = ssub.s32 %s13, 1
        // Predicated region
        $region13: #{ensemble_forward.1} parent=11 // pred_check
          %p143 = pneg %p60
        $region14: #{ensemble_forward.1} parent=11 // pred_check_branch
          %145 = sbr.rel (%p143) target = $region16
        $region15: #{ensemble_forward.1} parent=11 // pred_region
          _
        $region16: #{ensemble_forward.1} parent=11 // pred_fallthru
          _
        // Predicated region
        $region17: #{ensemble_forward.1} parent=11 // pred_check
          %p146 = pneg %p81
        $region18: #{ensemble_forward.1} parent=11 // pred_check_branch
          %148 = sbr.rel (%p146) target = $region20
        $region19: #{ensemble_forward.1} parent=11 // pred_region
          _
        $region20: #{ensemble_forward.1} parent=11 // pred_fallthru
          _
        // Predicated region
        $region21: #{ensemble_forward.1} parent=11 // pred_check
          %p149 = pneg %p102
        $region22: #{ensemble_forward.1} parent=11 // pred_check_branch
          %151 = sbr.rel (%p149) target = $region24
        $region23: #{ensemble_forward.1} parent=11 // pred_region
          _
        $region24: #{ensemble_forward.1} parent=11 // pred_fallthru
          _
      $region12: #{ensemble_forward.1} parent=5 // pred_fallthru
        _
      %p152 = scmp.lt.s32.totalorder %s13, 2
      // Predicated region
      $region25: #{ensemble_forward.1} parent=5 // pred_check
        %p153 = pneg %p152
      $region26: #{ensemble_forward.1} parent=5 // pred_check_branch
        %155 = sbr.rel (%p153) target = $region28
      $region27: #{ensemble_forward.1} parent=5 // pred_region
        // Predicated region
        $region29: #{ensemble_forward.1} parent=27 // pred_check
          %p156 = pneg %p33
        $region30: #{ensemble_forward.1} parent=27 // pred_check_branch
          %158 = sbr.rel (%p156) target = $region32
        $region31: #{ensemble_forward.1} parent=27 // pred_region
          %p159 = scmp.lt.s32.totalorder %s13, 1
          %s160 = scalar_select %p159, %s13, 1
          %s161 = smul.addr %s160, 8
          %s162 = smul.addr %s161, 4
          %s163 = scalar_lea.vmem %s0, %s162
        $region32: #{ensemble_forward.1} parent=27 // pred_fallthru
          _
      $region28: #{ensemble_forward.1} parent=5 // pred_fallthru
        _
      %p164 = scmp.le.s32.totalorder 1, %s13
      %p165 = scmp.lt.s32.totalorder %s13, 3
      %p166 = pnand %p164, %p165
      %p167 = pneg %p166
      // Predicated region
      $region33: #{ensemble_forward.1} parent=5 // pred_check
        _
      $region34: #{ensemble_forward.1} parent=5 // pred_check_branch
        %169 = sbr.rel (%p166) target = $region36
      $region35: #{ensemble_forward.1} parent=5 // pred_region
        %s170 = ssub.s32 %s13, 1
        %p171 = scmp.lt.s32.totalorder %s18, 1
        %s172 = scalar_select %p171, %s18, 1
        %s173 = smul.addr %s172, 8
        %s174 = smul.addr %s173, 4
        %s175 = scalar_lea.vmem %s0, %s174
        %p176 = pneg %p39
        %p177 = pneg %p36
        %p178 = pneg %p60
        %p179 = pneg %p57
        %p180 = pneg %p81
        %p181 = pneg %p78
        %p182 = pneg %p102
        %p183 = pneg %p99
        %p184 = pneg %p128
        %p185 = pneg %p125
        %s186 = sand.u32 %s115, 1
        %s187 = scalar_lea.sflag [#allocation3], %s186
        %s188 = sand.u32 %s115, 1
        %s189 = scalar_lea.vmem [#allocation2], %s188
        %p190 = scmp.lt.s32.totalorder %s18, 1
        %s191 = scalar_select %p190, %s18, 1
        %s192 = smul.addr %s191, 8
        %s193 = smul.addr %s192, 4
        %s194 = scalar_lea.vmem %s0, %s193
        %v196 = vld [vmem:[%s1] sm:$0xf]
        %v197 = vld [vmem:[%s1 + $0x4] sm:$0xf]
        %v198 = vld [vmem:[%s1 + $0x8] sm:$0xf]
        %v199 = vld [vmem:[%s1 + $0xc] sm:$0xf]
        %v200 = vld [vmem:[%s1 + $0x10] sm:$0xf]
        %v201 = vld [vmem:[%s1 + $0x14] sm:$0xf]
        %v202 = vld [vmem:[%s1 + $0x18] sm:$0xf]
        %v203 = vld [vmem:[%s1 + $0x1c] sm:$0xf]
        %v204 = vld [vmem:[%s1 + $0x20] sm:$0xf]
        %v205 = vld [vmem:[%s1 + $0x24] sm:$0xf]
        %v206 = vld [vmem:[%s1 + $0x28] sm:$0xf]
        %v207 = vld [vmem:[%s1 + $0x2c] sm:$0xf]
        %v208 = vld [vmem:[%s1 + $0x30] sm:$0xf]
        %v209 = vld [vmem:[%s1 + $0x34] sm:$0xf]
        %v210 = vld [vmem:[%s1 + $0x38] sm:$0xf]
        %v211 = vld [vmem:[%s1 + $0x3c] sm:$0xf]
        %v212 = vld [vmem:[%s194] sm:$0xff]
        %v213 = vld [vmem:[%s194 + $0x8] sm:$0xff]
        %v214 = vld [vmem:[%s194 + $0x10] sm:$0xff]
        %v215 = vld [vmem:[%s194 + $0x18] sm:$0xff]
        %v232 = vunpack.c.l.b16 %v196
        %v233 = vunpack.c.l.b16 %v197
        %v234 = vunpack.c.l.b16 %v198
        %v235 = vunpack.c.l.b16 %v199
        %v236 = vunpack.c.l.b16 %v200
        %v237 = vunpack.c.l.b16 %v201
        %v238 = vunpack.c.l.b16 %v202
        %v239 = vunpack.c.l.b16 %v203
        %v240 = vunpack.c.l.b16 %v204
        %v241 = vunpack.c.l.b16 %v205
        %v242 = vunpack.c.l.b16 %v206
        %v243 = vunpack.c.l.b16 %v207
        %v244 = vunpack.c.l.b16 %v208
        %v245 = vunpack.c.l.b16 %v209
        %v246 = vunpack.c.l.b16 %v210
        %v247 = vunpack.c.l.b16 %v211
        %v248 = vpack.c.b16 %v233, %v232
        %v249 = vpack.c.b16 %v235, %v234
        %v250 = vpack.c.b16 %v237, %v236
        %v251 = vpack.c.b16 %v239, %v238
        %v252 = vpack.c.b16 %v241, %v240
        %v253 = vpack.c.b16 %v243, %v242
        %v254 = vpack.c.b16 %v245, %v244
        %v255 = vpack.c.b16 %v247, %v246
        %v260 = vunpack.c.l.b16 %v212
        %v261 = vunpack.c.h.b16 %v212
        %v262 = vunpack.c.l.b16 %v213
        %v263 = vunpack.c.h.b16 %v213
        %v264 = vunpack.c.l.b16 %v214
        %v265 = vunpack.c.h.b16 %v214
        %v266 = vunpack.c.l.b16 %v215
        %v267 = vunpack.c.h.b16 %v215
        %v268 = vpack.c.b16 %v262, %v260
        %v269 = vpack.c.b16 %v263, %v261
        %v270 = vpack.c.b16 %v266, %v264
        %v271 = vpack.c.b16 %v267, %v265
        %vm276 = vcmask 261120
        %v278 = vsel %vm276, %v248, 0
        %v281 = vsel %vm276, %v249, 0
        %v284 = vsel %vm276, %v250, 0
        %v287 = vsel %vm276, %v251, 0
        %v290 = vsel %vm276, %v252, 0
        %v293 = vsel %vm276, %v253, 0
        %v296 = vsel %vm276, %v254, 0
        %v299 = vsel %vm276, %v255, 0
        %301 = vmatpush.bf16.msra.mxu0 0
        %302 = vmatpush.bf16.msra.mxu0 0
        %303 = vmatpush.bf16.msra.mxu0 0
        %304 = vmatpush.bf16.msra.mxu0 0
        %305 = vmatpush.bf16.msra.mxu0 0
        %306 = vmatpush.bf16.msra.mxu0 0
        %307 = vmatpush.bf16.msra.mxu0 %v270
        %308 = vmatpush.bf16.msra.mxu0 %v268
        %309 = vmatmul.bf16.gmra.mxu0 %v278
        %v310 = vpop.f32.mrf.mxu0
        %v311 = vadd.f32 0.0, %v310
        %v312 = vpop.f32.mrf.mxu0
        %v313 = vadd.f32 0.0, %v312
        %314 = vmatmul.bf16.gmra.mxu0 %v281
        %v315 = vpop.f32.mrf.mxu0
        %v316 = vadd.f32 0.0, %v315
        %v317 = vpop.f32.mrf.mxu0
        %v318 = vadd.f32 0.0, %v317
        %319 = vmatmul.bf16.gmra.mxu0 %v284
        %v320 = vpop.f32.mrf.mxu0
        %v321 = vadd.f32 0.0, %v320
        %v322 = vpop.f32.mrf.mxu0
        %v323 = vadd.f32 0.0, %v322
        %324 = vmatmul.bf16.gmra.mxu0 %v287
        %v325 = vpop.f32.mrf.mxu0
        %v326 = vadd.f32 0.0, %v325
        %v327 = vpop.f32.mrf.mxu0
        %v328 = vadd.f32 0.0, %v327
        %329 = vmatmul.bf16.gmra.mxu0 %v290
        %v330 = vpop.f32.mrf.mxu0
        %v331 = vadd.f32 0.0, %v330
        %v332 = vpop.f32.mrf.mxu0
        %v333 = vadd.f32 0.0, %v332
        %334 = vmatmul.bf16.gmra.mxu0 %v293
        %v335 = vpop.f32.mrf.mxu0
        %v336 = vadd.f32 0.0, %v335
        %v337 = vpop.f32.mrf.mxu0
        %v338 = vadd.f32 0.0, %v337
        %339 = vmatmul.bf16.gmra.mxu0 %v296
        %v340 = vpop.f32.mrf.mxu0
        %v341 = vadd.f32 0.0, %v340
        %v342 = vpop.f32.mrf.mxu0
        %v343 = vadd.f32 0.0, %v342
        %344 = vmatmul.bf16.gmra.mxu0 %v299
        %v345 = vpop.f32.mrf.mxu0
        %v346 = vadd.f32 0.0, %v345
        %v347 = vpop.f32.mrf.mxu0
        %v348 = vadd.f32 0.0, %v347
        %349 = vdwg.mxu0
        %350 = vmatpush.bf16.msra.mxu0 0
        %351 = vmatpush.bf16.msra.mxu0 0
        %352 = vmatpush.bf16.msra.mxu0 0
        %353 = vmatpush.bf16.msra.mxu0 0
        %354 = vmatpush.bf16.msra.mxu0 0
        %355 = vmatpush.bf16.msra.mxu0 0
        %356 = vmatpush.bf16.msra.mxu0 %v271
        %357 = vmatpush.bf16.msra.mxu0 %v269
        %358 = vmatmul.bf16.gmra.mxu0 %v278
        %v359 = vpop.f32.mrf.mxu0
        %v360 = vadd.f32 0.0, %v359
        %v361 = vpop.f32.mrf.mxu0
        %v362 = vadd.f32 0.0, %v361
        %363 = vmatmul.bf16.gmra.mxu0 %v281
        %v364 = vpop.f32.mrf.mxu0
        %v365 = vadd.f32 0.0, %v364
        %v366 = vpop.f32.mrf.mxu0
        %v367 = vadd.f32 0.0, %v366
        %368 = vmatmul.bf16.gmra.mxu0 %v284
        %v369 = vpop.f32.mrf.mxu0
        %v370 = vadd.f32 0.0, %v369
        %v371 = vpop.f32.mrf.mxu0
        %v372 = vadd.f32 0.0, %v371
        %373 = vmatmul.bf16.gmra.mxu0 %v287
        %v374 = vpop.f32.mrf.mxu0
        %v375 = vadd.f32 0.0, %v374
        %v376 = vpop.f32.mrf.mxu0
        %v377 = vadd.f32 0.0, %v376
        %378 = vmatmul.bf16.gmra.mxu0 %v290
        %v379 = vpop.f32.mrf.mxu0
        %v380 = vadd.f32 0.0, %v379
        %v381 = vpop.f32.mrf.mxu0
        %v382 = vadd.f32 0.0, %v381
        %383 = vmatmul.bf16.gmra.mxu0 %v293
        %v384 = vpop.f32.mrf.mxu0
        %v385 = vadd.f32 0.0, %v384
        %v386 = vpop.f32.mrf.mxu0
        %v387 = vadd.f32 0.0, %v386
        %388 = vmatmul.bf16.gmra.mxu0 %v296
        %v389 = vpop.f32.mrf.mxu0
        %v390 = vadd.f32 0.0, %v389
        %v391 = vpop.f32.mrf.mxu0
        %v392 = vadd.f32 0.0, %v391
        %393 = vmatmul.bf16.gmra.mxu0 %v299
        %v394 = vpop.f32.mrf.mxu0
        %v395 = vadd.f32 0.0, %v394
        %v396 = vpop.f32.mrf.mxu0
        %v397 = vadd.f32 0.0, %v396
        %398 = vdwg.mxu0
        %v399 = vlaneseq
        %v400 = vshrl.u32 %v399, 7
        %v401 = vadd.s32 %v400, 8
        %v402 = vadd.s32 %v400, 16
        %v403 = vadd.s32 %v400, 24
        %v404 = vadd.s32 %v400, 32
        %v405 = vadd.s32 %v400, 40
        %v406 = vadd.s32 %v400, 48
        %v407 = vadd.s32 %v400, 56
        %v408 = vadd.s32 %v400, 64
        %v409 = vadd.s32 %v400, 72
        %v410 = vadd.s32 %v400, 80
        %v411 = vadd.s32 %v400, 88
        %v412 = vadd.s32 %v400, 96
        %v413 = vadd.s32 %v400, 104
        %v414 = vadd.s32 %v400, 112
        %v415 = vadd.s32 %v400, 120
        %vm416 = vcmp.lt.s32.totalorder %v400, 32
        %vm417 = vcmp.lt.s32.totalorder %v401, 32
        %vm418 = vcmp.lt.s32.totalorder %v402, 32
        %vm419 = vcmp.lt.s32.totalorder %v403, 32
        %vm420 = vcmp.lt.s32.totalorder %v404, 32
        %vm421 = vcmp.lt.s32.totalorder %v405, 32
        %vm422 = vcmp.lt.s32.totalorder %v406, 32
        %vm423 = vcmp.lt.s32.totalorder %v407, 32
        %vm424 = vcmp.lt.s32.totalorder %v408, 32
        %vm425 = vcmp.lt.s32.totalorder %v409, 32
        %vm426 = vcmp.lt.s32.totalorder %v410, 32
        %vm427 = vcmp.lt.s32.totalorder %v411, 32
        %vm428 = vcmp.lt.s32.totalorder %v412, 32
        %vm429 = vcmp.lt.s32.totalorder %v413, 32
        %vm430 = vcmp.lt.s32.totalorder %v414, 32
        %vm431 = vcmp.lt.s32.totalorder %v415, 32
        %v432 = vxor.u32 %v311, 2147483648
        %v433 = vxor.u32 %v360, 2147483648
        %v434 = vxor.u32 %v313, 2147483648
        %v435 = vxor.u32 %v362, 2147483648
        %v436 = vxor.u32 %v316, 2147483648
        %v437 = vxor.u32 %v365, 2147483648
        %v438 = vxor.u32 %v318, 2147483648
        %v439 = vxor.u32 %v367, 2147483648
        %v440 = vxor.u32 %v321, 2147483648
        %v441 = vxor.u32 %v370, 2147483648
        %v442 = vxor.u32 %v323, 2147483648
        %v443 = vxor.u32 %v372, 2147483648
        %v444 = vxor.u32 %v326, 2147483648
        %v445 = vxor.u32 %v375, 2147483648
        %v446 = vxor.u32 %v328, 2147483648
        %v447 = vxor.u32 %v377, 2147483648
        %v448 = vxor.u32 %v331, 2147483648
        %v449 = vxor.u32 %v380, 2147483648
        %v450 = vxor.u32 %v333, 2147483648
        %v451 = vxor.u32 %v382, 2147483648
        %v452 = vxor.u32 %v336, 2147483648
        %v453 = vxor.u32 %v385, 2147483648
        %v454 = vxor.u32 %v338, 2147483648
        %v455 = vxor.u32 %v387, 2147483648
        %v456 = vxor.u32 %v341, 2147483648
        %v457 = vxor.u32 %v390, 2147483648
        %v458 = vxor.u32 %v343, 2147483648
        %v459 = vxor.u32 %v392, 2147483648
        %v460 = vxor.u32 %v346, 2147483648
        %v461 = vxor.u32 %v395, 2147483648
        %v462 = vxor.u32 %v348, 2147483648
        %v463 = vxor.u32 %v397, 2147483648
        %v464 = vmul.f32 %v432, 1.442695
        %v465 = vpow.pop %v464
        %v466 = vmul.f32 %v433, 1.442695
        %v467 = vpow.pop %v466
        %v468 = vmul.f32 %v434, 1.442695
        %v469 = vpow.pop %v468
        %v470 = vmul.f32 %v435, 1.442695
        %v471 = vpow.pop %v470
        %v472 = vmul.f32 %v436, 1.442695
        %v473 = vpow.pop %v472
        %v474 = vmul.f32 %v437, 1.442695
        %v475 = vpow.pop %v474
        %v476 = vmul.f32 %v438, 1.442695
        %v477 = vpow.pop %v476
        %v478 = vmul.f32 %v439, 1.442695
        %v479 = vpow.pop %v478
        %v480 = vmul.f32 %v440, 1.442695
        %v481 = vpow.pop %v480
        %v482 = vmul.f32 %v441, 1.442695
        %v483 = vpow.pop %v482
        %v484 = vmul.f32 %v442, 1.442695
        %v485 = vpow.pop %v484
        %v486 = vmul.f32 %v443, 1.442695
        %v487 = vpow.pop %v486
        %v488 = vmul.f32 %v444, 1.442695
        %v489 = vpow.pop %v488
        %v490 = vmul.f32 %v445, 1.442695
        %v491 = vpow.pop %v490
        %v492 = vmul.f32 %v446, 1.442695
        %v493 = vpow.pop %v492
        %v494 = vmul.f32 %v447, 1.442695
        %v495 = vpow.pop %v494
        %v496 = vmul.f32 %v448, 1.442695
        %v497 = vpow.pop %v496
        %v498 = vmul.f32 %v449, 1.442695
        %v499 = vpow.pop %v498
        %v500 = vmul.f32 %v450, 1.442695
        %v501 = vpow.pop %v500
        %v502 = vmul.f32 %v451, 1.442695
        %v503 = vpow.pop %v502
        %v504 = vmul.f32 %v452, 1.442695
        %v505 = vpow.pop %v504
        %v506 = vmul.f32 %v453, 1.442695
        %v507 = vpow.pop %v506
        %v508 = vmul.f32 %v454, 1.442695
        %v509 = vpow.pop %v508
        %v510 = vmul.f32 %v455, 1.442695
        %v511 = vpow.pop %v510
        %v512 = vmul.f32 %v456, 1.442695
        %v513 = vpow.pop %v512
        %v514 = vmul.f32 %v457, 1.442695
        %v515 = vpow.pop %v514
        %v516 = vmul.f32 %v458, 1.442695
        %v517 = vpow.pop %v516
        %v518 = vmul.f32 %v459, 1.442695
        %v519 = vpow.pop %v518
        %v520 = vmul.f32 %v460, 1.442695
        %v521 = vpow.pop %v520
        %v522 = vmul.f32 %v461, 1.442695
        %v523 = vpow.pop %v522
        %v524 = vmul.f32 %v462, 1.442695
        %v525 = vpow.pop %v524
        %v526 = vmul.f32 %v463, 1.442695
        %v527 = vpow.pop %v526
        %v528 = vadd.f32 %v465, 1.0
        %v529 = vadd.f32 %v467, 1.0
        %v530 = vadd.f32 %v469, 1.0
        %v531 = vadd.f32 %v471, 1.0
        %v532 = vadd.f32 %v473, 1.0
        %v533 = vadd.f32 %v475, 1.0
        %v534 = vadd.f32 %v477, 1.0
        %v535 = vadd.f32 %v479, 1.0
        %v536 = vadd.f32 %v481, 1.0
        %v537 = vadd.f32 %v483, 1.0
        %v538 = vadd.f32 %v485, 1.0
        %v539 = vadd.f32 %v487, 1.0
        %v540 = vadd.f32 %v489, 1.0
        %v541 = vadd.f32 %v491, 1.0
        %v542 = vadd.f32 %v493, 1.0
        %v543 = vadd.f32 %v495, 1.0
        %v544 = vadd.f32 %v497, 1.0
        %v545 = vadd.f32 %v499, 1.0
        %v546 = vadd.f32 %v501, 1.0
        %v547 = vadd.f32 %v503, 1.0
        %v548 = vadd.f32 %v505, 1.0
        %v549 = vadd.f32 %v507, 1.0
        %v550 = vadd.f32 %v509, 1.0
        %v551 = vadd.f32 %v511, 1.0
        %v552 = vadd.f32 %v513, 1.0
        %v553 = vadd.f32 %v515, 1.0
        %v554 = vadd.f32 %v517, 1.0
        %v555 = vadd.f32 %v519, 1.0
        %v556 = vadd.f32 %v521, 1.0
        %v557 = vadd.f32 %v523, 1.0
        %v558 = vadd.f32 %v525, 1.0
        %v559 = vadd.f32 %v527, 1.0
        %v560 = vrcp.pop %v528
        %v561 = vmul.f32 %v528, %v560
        %v562 = vsub.f32 1.0, %v561
        %v563 = vmul.f32 %v560, %v562
        %v564 = vadd.f32 %v560, %v563
        %vm565 = vweird.f32 %v528
        %vm566 = vweird.f32 %v560
        %vm567 = vmor %vm565, %vm566
        %v568 = vsel %vm567, %v560, %v564
        %v569 = vand.u32 2147483647, %v528
        %vm570 = vcmp.eq.f32.partialorder %v569, 8.507059e+37
        %v571 = vand.u32 %v528, 2147483648
        %v572 = vor.u32 1.1754944e-38, %v571
        %v573 = vsel %vm570, %v572, %v568
        %v574 = vmul.f32 1.0, %v573
        %v575 = vrcp.pop %v529
        %v576 = vmul.f32 %v529, %v575
        %v577 = vsub.f32 1.0, %v576
        %v578 = vmul.f32 %v575, %v577
        %v579 = vadd.f32 %v575, %v578
        %vm580 = vweird.f32 %v529
        %vm581 = vweird.f32 %v575
        %vm582 = vmor %vm580, %vm581
        %v583 = vsel %vm582, %v575, %v579
        %v584 = vand.u32 2147483647, %v529
        %vm585 = vcmp.eq.f32.partialorder %v584, 8.507059e+37
        %v586 = vand.u32 %v529, 2147483648
        %v587 = vor.u32 1.1754944e-38, %v586
        %v588 = vsel %vm585, %v587, %v583
        %v589 = vmul.f32 1.0, %v588
        %v590 = vrcp.pop %v530
        %v591 = vmul.f32 %v530, %v590
        %v592 = vsub.f32 1.0, %v591
        %v593 = vmul.f32 %v590, %v592
        %v594 = vadd.f32 %v590, %v593
        %vm595 = vweird.f32 %v530
        %vm596 = vweird.f32 %v590
        %vm597 = vmor %vm595, %vm596
        %v598 = vsel %vm597, %v590, %v594
        %v599 = vand.u32 2147483647, %v530
        %vm600 = vcmp.eq.f32.partialorder %v599, 8.507059e+37
        %v601 = vand.u32 %v530, 2147483648
        %v602 = vor.u32 1.1754944e-38, %v601
        %v603 = vsel %vm600, %v602, %v598
        %v604 = vmul.f32 1.0, %v603
        %v605 = vrcp.pop %v531
        %v606 = vmul.f32 %v531, %v605
        %v607 = vsub.f32 1.0, %v606
        %v608 = vmul.f32 %v605, %v607
        %v609 = vadd.f32 %v605, %v608
        %vm610 = vweird.f32 %v531
        %vm611 = vweird.f32 %v605
        %vm612 = vmor %vm610, %vm611
        %v613 = vsel %vm612, %v605, %v609
        %v614 = vand.u32 2147483647, %v531
        %vm615 = vcmp.eq.f32.partialorder %v614, 8.507059e+37
        %v616 = vand.u32 %v531, 2147483648
        %v617 = vor.u32 1.1754944e-38, %v616
        %v618 = vsel %vm615, %v617, %v613
        %v619 = vmul.f32 1.0, %v618
        %v620 = vrcp.pop %v532
        %v621 = vmul.f32 %v532, %v620
        %v622 = vsub.f32 1.0, %v621
        %v623 = vmul.f32 %v620, %v622
        %v624 = vadd.f32 %v620, %v623
        %vm625 = vweird.f32 %v532
        %vm626 = vweird.f32 %v620
        %vm627 = vmor %vm625, %vm626
        %v628 = vsel %vm627, %v620, %v624
        %v629 = vand.u32 2147483647, %v532
        %vm630 = vcmp.eq.f32.partialorder %v629, 8.507059e+37
        %v631 = vand.u32 %v532, 2147483648
        %v632 = vor.u32 1.1754944e-38, %v631
        %v633 = vsel %vm630, %v632, %v628
        %v634 = vmul.f32 1.0, %v633
        %v635 = vrcp.pop %v533
        %v636 = vmul.f32 %v533, %v635
        %v637 = vsub.f32 1.0, %v636
        %v638 = vmul.f32 %v635, %v637
        %v639 = vadd.f32 %v635, %v638
        %vm640 = vweird.f32 %v533
        %vm641 = vweird.f32 %v635
        %vm642 = vmor %vm640, %vm641
        %v643 = vsel %vm642, %v635, %v639
        %v644 = vand.u32 2147483647, %v533
        %vm645 = vcmp.eq.f32.partialorder %v644, 8.507059e+37
        %v646 = vand.u32 %v533, 2147483648
        %v647 = vor.u32 1.1754944e-38, %v646
        %v648 = vsel %vm645, %v647, %v643
        %v649 = vmul.f32 1.0, %v648
        %v650 = vrcp.pop %v534
        %v651 = vmul.f32 %v534, %v650
        %v652 = vsub.f32 1.0, %v651
        %v653 = vmul.f32 %v650, %v652
        %v654 = vadd.f32 %v650, %v653
        %vm655 = vweird.f32 %v534
        %vm656 = vweird.f32 %v650
        %vm657 = vmor %vm655, %vm656
        %v658 = vsel %vm657, %v650, %v654
        %v659 = vand.u32 2147483647, %v534
        %vm660 = vcmp.eq.f32.partialorder %v659, 8.507059e+37
        %v661 = vand.u32 %v534, 2147483648
        %v662 = vor.u32 1.1754944e-38, %v661
        %v663 = vsel %vm660, %v662, %v658
        %v664 = vmul.f32 1.0, %v663
        %v665 = vrcp.pop %v535
        %v666 = vmul.f32 %v535, %v665
        %v667 = vsub.f32 1.0, %v666
        %v668 = vmul.f32 %v665, %v667
        %v669 = vadd.f32 %v665, %v668
        %vm670 = vweird.f32 %v535
        %vm671 = vweird.f32 %v665
        %vm672 = vmor %vm670, %vm671
        %v673 = vsel %vm672, %v665, %v669
        %v674 = vand.u32 2147483647, %v535
        %vm675 = vcmp.eq.f32.partialorder %v674, 8.507059e+37
        %v676 = vand.u32 %v535, 2147483648
        %v677 = vor.u32 1.1754944e-38, %v676
        %v678 = vsel %vm675, %v677, %v673
        %v679 = vmul.f32 1.0, %v678
        %v680 = vrcp.pop %v536
        %v681 = vmul.f32 %v536, %v680
        %v682 = vsub.f32 1.0, %v681
        %v683 = vmul.f32 %v680, %v682
        %v684 = vadd.f32 %v680, %v683
        %vm685 = vweird.f32 %v536
        %vm686 = vweird.f32 %v680
        %vm687 = vmor %vm685, %vm686
        %v688 = vsel %vm687, %v680, %v684
        %v689 = vand.u32 2147483647, %v536
        %vm690 = vcmp.eq.f32.partialorder %v689, 8.507059e+37
        %v691 = vand.u32 %v536, 2147483648
        %v692 = vor.u32 1.1754944e-38, %v691
        %v693 = vsel %vm690, %v692, %v688
        %v694 = vmul.f32 1.0, %v693
        %v695 = vrcp.pop %v537
        %v696 = vmul.f32 %v537, %v695
        %v697 = vsub.f32 1.0, %v696
        %v698 = vmul.f32 %v695, %v697
        %v699 = vadd.f32 %v695, %v698
        %vm700 = vweird.f32 %v537
        %vm701 = vweird.f32 %v695
        %vm702 = vmor %vm700, %vm701
        %v703 = vsel %vm702, %v695, %v699
        %v704 = vand.u32 2147483647, %v537
        %vm705 = vcmp.eq.f32.partialorder %v704, 8.507059e+37
        %v706 = vand.u32 %v537, 2147483648
        %v707 = vor.u32 1.1754944e-38, %v706
        %v708 = vsel %vm705, %v707, %v703
        %v709 = vmul.f32 1.0, %v708
        %v710 = vrcp.pop %v538
        %v711 = vmul.f32 %v538, %v710
        %v712 = vsub.f32 1.0, %v711
        %v713 = vmul.f32 %v710, %v712
        %v714 = vadd.f32 %v710, %v713
        %vm715 = vweird.f32 %v538
        %vm716 = vweird.f32 %v710
        %vm717 = vmor %vm715, %vm716
        %v718 = vsel %vm717, %v710, %v714
        %v719 = vand.u32 2147483647, %v538
        %vm720 = vcmp.eq.f32.partialorder %v719, 8.507059e+37
        %v721 = vand.u32 %v538, 2147483648
        %v722 = vor.u32 1.1754944e-38, %v721
        %v723 = vsel %vm720, %v722, %v718
        %v724 = vmul.f32 1.0, %v723
        %v725 = vrcp.pop %v539
        %v726 = vmul.f32 %v539, %v725
        %v727 = vsub.f32 1.0, %v726
        %v728 = vmul.f32 %v725, %v727
        %v729 = vadd.f32 %v725, %v728
        %vm730 = vweird.f32 %v539
        %vm731 = vweird.f32 %v725
        %vm732 = vmor %vm730, %vm731
        %v733 = vsel %vm732, %v725, %v729
        %v734 = vand.u32 2147483647, %v539
        %vm735 = vcmp.eq.f32.partialorder %v734, 8.507059e+37
        %v736 = vand.u32 %v539, 2147483648
        %v737 = vor.u32 1.1754944e-38, %v736
        %v738 = vsel %vm735, %v737, %v733
        %v739 = vmul.f32 1.0, %v738
        %v740 = vrcp.pop %v540
        %v741 = vmul.f32 %v540, %v740
        %v742 = vsub.f32 1.0, %v741
        %v743 = vmul.f32 %v740, %v742
        %v744 = vadd.f32 %v740, %v743
        %vm745 = vweird.f32 %v540
        %vm746 = vweird.f32 %v740
        %vm747 = vmor %vm745, %vm746
        %v748 = vsel %vm747, %v740, %v744
        %v749 = vand.u32 2147483647, %v540
        %vm750 = vcmp.eq.f32.partialorder %v749, 8.507059e+37
        %v751 = vand.u32 %v540, 2147483648
        %v752 = vor.u32 1.1754944e-38, %v751
        %v753 = vsel %vm750, %v752, %v748
        %v754 = vmul.f32 1.0, %v753
        %v755 = vrcp.pop %v541
        %v756 = vmul.f32 %v541, %v755
        %v757 = vsub.f32 1.0, %v756
        %v758 = vmul.f32 %v755, %v757
        %v759 = vadd.f32 %v755, %v758
        %vm760 = vweird.f32 %v541
        %vm761 = vweird.f32 %v755
        %vm762 = vmor %vm760, %vm761
        %v763 = vsel %vm762, %v755, %v759
        %v764 = vand.u32 2147483647, %v541
        %vm765 = vcmp.eq.f32.partialorder %v764, 8.507059e+37
        %v766 = vand.u32 %v541, 2147483648
        %v767 = vor.u32 1.1754944e-38, %v766
        %v768 = vsel %vm765, %v767, %v763
        %v769 = vmul.f32 1.0, %v768
        %v770 = vrcp.pop %v542
        %v771 = vmul.f32 %v542, %v770
        %v772 = vsub.f32 1.0, %v771
        %v773 = vmul.f32 %v770, %v772
        %v774 = vadd.f32 %v770, %v773
        %vm775 = vweird.f32 %v542
        %vm776 = vweird.f32 %v770
        %vm777 = vmor %vm775, %vm776
        %v778 = vsel %vm777, %v770, %v774
        %v779 = vand.u32 2147483647, %v542
        %vm780 = vcmp.eq.f32.partialorder %v779, 8.507059e+37
        %v781 = vand.u32 %v542, 2147483648
        %v782 = vor.u32 1.1754944e-38, %v781
        %v783 = vsel %vm780, %v782, %v778
        %v784 = vmul.f32 1.0, %v783
        %v785 = vrcp.pop %v543
        %v786 = vmul.f32 %v543, %v785
        %v787 = vsub.f32 1.0, %v786
        %v788 = vmul.f32 %v785, %v787
        %v789 = vadd.f32 %v785, %v788
        %vm790 = vweird.f32 %v543
        %vm791 = vweird.f32 %v785
        %vm792 = vmor %vm790, %vm791
        %v793 = vsel %vm792, %v785, %v789
        %v794 = vand.u32 2147483647, %v543
        %vm795 = vcmp.eq.f32.partialorder %v794, 8.507059e+37
        %v796 = vand.u32 %v543, 2147483648
        %v797 = vor.u32 1.1754944e-38, %v796
        %v798 = vsel %vm795, %v797, %v793
        %v799 = vmul.f32 1.0, %v798
        %v800 = vrcp.pop %v544
        %v801 = vmul.f32 %v544, %v800
        %v802 = vsub.f32 1.0, %v801
        %v803 = vmul.f32 %v800, %v802
        %v804 = vadd.f32 %v800, %v803
        %vm805 = vweird.f32 %v544
        %vm806 = vweird.f32 %v800
        %vm807 = vmor %vm805, %vm806
        %v808 = vsel %vm807, %v800, %v804
        %v809 = vand.u32 2147483647, %v544
        %vm810 = vcmp.eq.f32.partialorder %v809, 8.507059e+37
        %v811 = vand.u32 %v544, 2147483648
        %v812 = vor.u32 1.1754944e-38, %v811
        %v813 = vsel %vm810, %v812, %v808
        %v814 = vmul.f32 1.0, %v813
        %v815 = vrcp.pop %v545
        %v816 = vmul.f32 %v545, %v815
        %v817 = vsub.f32 1.0, %v816
        %v818 = vmul.f32 %v815, %v817
        %v819 = vadd.f32 %v815, %v818
        %vm820 = vweird.f32 %v545
        %vm821 = vweird.f32 %v815
        %vm822 = vmor %vm820, %vm821
        %v823 = vsel %vm822, %v815, %v819
        %v824 = vand.u32 2147483647, %v545
        %vm825 = vcmp.eq.f32.partialorder %v824, 8.507059e+37
        %v826 = vand.u32 %v545, 2147483648
        %v827 = vor.u32 1.1754944e-38, %v826
        %v828 = vsel %vm825, %v827, %v823
        %v829 = vmul.f32 1.0, %v828
        %v830 = vrcp.pop %v546
        %v831 = vmul.f32 %v546, %v830
        %v832 = vsub.f32 1.0, %v831
        %v833 = vmul.f32 %v830, %v832
        %v834 = vadd.f32 %v830, %v833
        %vm835 = vweird.f32 %v546
        %vm836 = vweird.f32 %v830
        %vm837 = vmor %vm835, %vm836
        %v838 = vsel %vm837, %v830, %v834
        %v839 = vand.u32 2147483647, %v546
        %vm840 = vcmp.eq.f32.partialorder %v839, 8.507059e+37
        %v841 = vand.u32 %v546, 2147483648
        %v842 = vor.u32 1.1754944e-38, %v841
        %v843 = vsel %vm840, %v842, %v838
        %v844 = vmul.f32 1.0, %v843
        %v845 = vrcp.pop %v547
        %v846 = vmul.f32 %v547, %v845
        %v847 = vsub.f32 1.0, %v846
        %v848 = vmul.f32 %v845, %v847
        %v849 = vadd.f32 %v845, %v848
        %vm850 = vweird.f32 %v547
        %vm851 = vweird.f32 %v845
        %vm852 = vmor %vm850, %vm851
        %v853 = vsel %vm852, %v845, %v849
        %v854 = vand.u32 2147483647, %v547
        %vm855 = vcmp.eq.f32.partialorder %v854, 8.507059e+37
        %v856 = vand.u32 %v547, 2147483648
        %v857 = vor.u32 1.1754944e-38, %v856
        %v858 = vsel %vm855, %v857, %v853
        %v859 = vmul.f32 1.0, %v858
        %v860 = vrcp.pop %v548
        %v861 = vmul.f32 %v548, %v860
        %v862 = vsub.f32 1.0, %v861
        %v863 = vmul.f32 %v860, %v862
        %v864 = vadd.f32 %v860, %v863
        %vm865 = vweird.f32 %v548
        %vm866 = vweird.f32 %v860
        %vm867 = vmor %vm865, %vm866
        %v868 = vsel %vm867, %v860, %v864
        %v869 = vand.u32 2147483647, %v548
        %vm870 = vcmp.eq.f32.partialorder %v869, 8.507059e+37
        %v871 = vand.u32 %v548, 2147483648
        %v872 = vor.u32 1.1754944e-38, %v871
        %v873 = vsel %vm870, %v872, %v868
        %v874 = vmul.f32 1.0, %v873
        %v875 = vrcp.pop %v549
        %v876 = vmul.f32 %v549, %v875
        %v877 = vsub.f32 1.0, %v876
        %v878 = vmul.f32 %v875, %v877
        %v879 = vadd.f32 %v875, %v878
        %vm880 = vweird.f32 %v549
        %vm881 = vweird.f32 %v875
        %vm882 = vmor %vm880, %vm881
        %v883 = vsel %vm882, %v875, %v879
        %v884 = vand.u32 2147483647, %v549
        %vm885 = vcmp.eq.f32.partialorder %v884, 8.507059e+37
        %v886 = vand.u32 %v549, 2147483648
        %v887 = vor.u32 1.1754944e-38, %v886
        %v888 = vsel %vm885, %v887, %v883
        %v889 = vmul.f32 1.0, %v888
        %v890 = vrcp.pop %v550
        %v891 = vmul.f32 %v550, %v890
        %v892 = vsub.f32 1.0, %v891
        %v893 = vmul.f32 %v890, %v892
        %v894 = vadd.f32 %v890, %v893
        %vm895 = vweird.f32 %v550
        %vm896 = vweird.f32 %v890
        %vm897 = vmor %vm895, %vm896
        %v898 = vsel %vm897, %v890, %v894
        %v899 = vand.u32 2147483647, %v550
        %vm900 = vcmp.eq.f32.partialorder %v899, 8.507059e+37
        %v901 = vand.u32 %v550, 2147483648
        %v902 = vor.u32 1.1754944e-38, %v901
        %v903 = vsel %vm900, %v902, %v898
        %v904 = vmul.f32 1.0, %v903
        %v905 = vrcp.pop %v551
        %v906 = vmul.f32 %v551, %v905
        %v907 = vsub.f32 1.0, %v906
        %v908 = vmul.f32 %v905, %v907
        %v909 = vadd.f32 %v905, %v908
        %vm910 = vweird.f32 %v551
        %vm911 = vweird.f32 %v905
        %vm912 = vmor %vm910, %vm911
        %v913 = vsel %vm912, %v905, %v909
        %v914 = vand.u32 2147483647, %v551
        %vm915 = vcmp.eq.f32.partialorder %v914, 8.507059e+37
        %v916 = vand.u32 %v551, 2147483648
        %v917 = vor.u32 1.1754944e-38, %v916
        %v918 = vsel %vm915, %v917, %v913
        %v919 = vmul.f32 1.0, %v918
        %v920 = vrcp.pop %v552
        %v921 = vmul.f32 %v552, %v920
        %v922 = vsub.f32 1.0, %v921
        %v923 = vmul.f32 %v920, %v922
        %v924 = vadd.f32 %v920, %v923
        %vm925 = vweird.f32 %v552
        %vm926 = vweird.f32 %v920
        %vm927 = vmor %vm925, %vm926
        %v928 = vsel %vm927, %v920, %v924
        %v929 = vand.u32 2147483647, %v552
        %vm930 = vcmp.eq.f32.partialorder %v929, 8.507059e+37
        %v931 = vand.u32 %v552, 2147483648
        %v932 = vor.u32 1.1754944e-38, %v931
        %v933 = vsel %vm930, %v932, %v928
        %v934 = vmul.f32 1.0, %v933
        %v935 = vrcp.pop %v553
        %v936 = vmul.f32 %v553, %v935
        %v937 = vsub.f32 1.0, %v936
        %v938 = vmul.f32 %v935, %v937
        %v939 = vadd.f32 %v935, %v938
        %vm940 = vweird.f32 %v553
        %vm941 = vweird.f32 %v935
        %vm942 = vmor %vm940, %vm941
        %v943 = vsel %vm942, %v935, %v939
        %v944 = vand.u32 2147483647, %v553
        %vm945 = vcmp.eq.f32.partialorder %v944, 8.507059e+37
        %v946 = vand.u32 %v553, 2147483648
        %v947 = vor.u32 1.1754944e-38, %v946
        %v948 = vsel %vm945, %v947, %v943
        %v949 = vmul.f32 1.0, %v948
        %v950 = vrcp.pop %v554
        %v951 = vmul.f32 %v554, %v950
        %v952 = vsub.f32 1.0, %v951
        %v953 = vmul.f32 %v950, %v952
        %v954 = vadd.f32 %v950, %v953
        %vm955 = vweird.f32 %v554
        %vm956 = vweird.f32 %v950
        %vm957 = vmor %vm955, %vm956
        %v958 = vsel %vm957, %v950, %v954
        %v959 = vand.u32 2147483647, %v554
        %vm960 = vcmp.eq.f32.partialorder %v959, 8.507059e+37
        %v961 = vand.u32 %v554, 2147483648
        %v962 = vor.u32 1.1754944e-38, %v961
        %v963 = vsel %vm960, %v962, %v958
        %v964 = vmul.f32 1.0, %v963
        %v965 = vrcp.pop %v555
        %v966 = vmul.f32 %v555, %v965
        %v967 = vsub.f32 1.0, %v966
        %v968 = vmul.f32 %v965, %v967
        %v969 = vadd.f32 %v965, %v968
        %vm970 = vweird.f32 %v555
        %vm971 = vweird.f32 %v965
        %vm972 = vmor %vm970, %vm971
        %v973 = vsel %vm972, %v965, %v969
        %v974 = vand.u32 2147483647, %v555
        %vm975 = vcmp.eq.f32.partialorder %v974, 8.507059e+37
        %v976 = vand.u32 %v555, 2147483648
        %v977 = vor.u32 1.1754944e-38, %v976
        %v978 = vsel %vm975, %v977, %v973
        %v979 = vmul.f32 1.0, %v978
        %v980 = vrcp.pop %v556
        %v981 = vmul.f32 %v556, %v980
        %v982 = vsub.f32 1.0, %v981
        %v983 = vmul.f32 %v980, %v982
        %v984 = vadd.f32 %v980, %v983
        %vm985 = vweird.f32 %v556
        %vm986 = vweird.f32 %v980
        %vm987 = vmor %vm985, %vm986
        %v988 = vsel %vm987, %v980, %v984
        %v989 = vand.u32 2147483647, %v556
        %vm990 = vcmp.eq.f32.partialorder %v989, 8.507059e+37
        %v991 = vand.u32 %v556, 2147483648
        %v992 = vor.u32 1.1754944e-38, %v991
        %v993 = vsel %vm990, %v992, %v988
        %v994 = vmul.f32 1.0, %v993
        %v995 = vrcp.pop %v557
        %v996 = vmul.f32 %v557, %v995
        %v997 = vsub.f32 1.0, %v996
        %v998 = vmul.f32 %v995, %v997
        %v999 = vadd.f32 %v995, %v998
        %vm1000 = vweird.f32 %v557
        %vm1001 = vweird.f32 %v995
        %vm1002 = vmor %vm1000, %vm1001
        %v1003 = vsel %vm1002, %v995, %v999
        %v1004 = vand.u32 2147483647, %v557
        %vm1005 = vcmp.eq.f32.partialorder %v1004, 8.507059e+37
        %v1006 = vand.u32 %v557, 2147483648
        %v1007 = vor.u32 1.1754944e-38, %v1006
        %v1008 = vsel %vm1005, %v1007, %v1003
        %v1009 = vmul.f32 1.0, %v1008
        %v1010 = vrcp.pop %v558
        %v1011 = vmul.f32 %v558, %v1010
        %v1012 = vsub.f32 1.0, %v1011
        %v1013 = vmul.f32 %v1010, %v1012
        %v1014 = vadd.f32 %v1010, %v1013
        %vm1015 = vweird.f32 %v558
        %vm1016 = vweird.f32 %v1010
        %vm1017 = vmor %vm1015, %vm1016
        %v1018 = vsel %vm1017, %v1010, %v1014
        %v1019 = vand.u32 2147483647, %v558
        %vm1020 = vcmp.eq.f32.partialorder %v1019, 8.507059e+37
        %v1021 = vand.u32 %v558, 2147483648
        %v1022 = vor.u32 1.1754944e-38, %v1021
        %v1023 = vsel %vm1020, %v1022, %v1018
        %v1024 = vmul.f32 1.0, %v1023
        %v1025 = vrcp.pop %v559
        %v1026 = vmul.f32 %v559, %v1025
        %v1027 = vsub.f32 1.0, %v1026
        %v1028 = vmul.f32 %v1025, %v1027
        %v1029 = vadd.f32 %v1025, %v1028
        %vm1030 = vweird.f32 %v559
        %vm1031 = vweird.f32 %v1025
        %vm1032 = vmor %vm1030, %vm1031
        %v1033 = vsel %vm1032, %v1025, %v1029
        %v1034 = vand.u32 2147483647, %v559
        %vm1035 = vcmp.eq.f32.partialorder %v1034, 8.507059e+37
        %v1036 = vand.u32 %v559, 2147483648
        %v1037 = vor.u32 1.1754944e-38, %v1036
        %v1038 = vsel %vm1035, %v1037, %v1033
        %v1039 = vmul.f32 1.0, %v1038
        %v1040 = vmul.f32 %v311, %v574
        %v1041 = vmul.f32 %v360, %v589
        %v1042 = vmul.f32 %v313, %v604
        %v1043 = vmul.f32 %v362, %v619
        %v1044 = vmul.f32 %v316, %v634
        %v1045 = vmul.f32 %v365, %v649
        %v1046 = vmul.f32 %v318, %v664
        %v1047 = vmul.f32 %v367, %v679
        %v1048 = vmul.f32 %v321, %v694
        %v1049 = vmul.f32 %v370, %v709
        %v1050 = vmul.f32 %v323, %v724
        %v1051 = vmul.f32 %v372, %v739
        %v1052 = vmul.f32 %v326, %v754
        %v1053 = vmul.f32 %v375, %v769
        %v1054 = vmul.f32 %v328, %v784
        %v1055 = vmul.f32 %v377, %v799
        %v1056 = vmul.f32 %v331, %v814
        %v1057 = vmul.f32 %v380, %v829
        %v1058 = vmul.f32 %v333, %v844
        %v1059 = vmul.f32 %v382, %v859
        %v1060 = vmul.f32 %v336, %v874
        %v1061 = vmul.f32 %v385, %v889
        %v1062 = vmul.f32 %v338, %v904
        %v1063 = vmul.f32 %v387, %v919
        %v1064 = vmul.f32 %v341, %v934
        %v1065 = vmul.f32 %v390, %v949
        %v1066 = vmul.f32 %v343, %v964
        %v1067 = vmul.f32 %v392, %v979
        %v1068 = vmul.f32 %v346, %v994
        %v1069 = vmul.f32 %v395, %v1009
        %v1070 = vmul.f32 %v348, %v1024
        %v1071 = vmul.f32 %v397, %v1039
        %v1072 = vmax.f32 %v311, 0.0
        %v1073 = vmax.f32 %v360, 0.0
        %v1074 = vmax.f32 %v313, 0.0
        %v1075 = vmax.f32 %v362, 0.0
        %v1076 = vmax.f32 %v316, 0.0
        %v1077 = vmax.f32 %v365, 0.0
        %v1078 = vmax.f32 %v318, 0.0
        %v1079 = vmax.f32 %v367, 0.0
        %v1080 = vmax.f32 %v321, 0.0
        %v1081 = vmax.f32 %v370, 0.0
        %v1082 = vmax.f32 %v323, 0.0
        %v1083 = vmax.f32 %v372, 0.0
        %v1084 = vmax.f32 %v326, 0.0
        %v1085 = vmax.f32 %v375, 0.0
        %v1086 = vmax.f32 %v328, 0.0
        %v1087 = vmax.f32 %v377, 0.0
        %v1088 = vmax.f32 %v331, 0.0
        %v1089 = vmax.f32 %v380, 0.0
        %v1090 = vmax.f32 %v333, 0.0
        %v1091 = vmax.f32 %v382, 0.0
        %v1092 = vmax.f32 %v336, 0.0
        %v1093 = vmax.f32 %v385, 0.0
        %v1094 = vmax.f32 %v338, 0.0
        %v1095 = vmax.f32 %v387, 0.0
        %v1096 = vmax.f32 %v341, 0.0
        %v1097 = vmax.f32 %v390, 0.0
        %v1098 = vmax.f32 %v343, 0.0
        %v1099 = vmax.f32 %v392, 0.0
        %v1100 = vmax.f32 %v346, 0.0
        %v1101 = vmax.f32 %v395, 0.0
        %v1102 = vmax.f32 %v348, 0.0
        %v1103 = vmax.f32 %v397, 0.0
        %v1104 = vsel %vm416, %v1040, %v1072
        %v1105 = vsel %vm416, %v1041, %v1073
        %v1106 = vsel %vm417, %v1042, %v1074
        %v1107 = vsel %vm417, %v1043, %v1075
        %v1108 = vsel %vm418, %v1044, %v1076
        %v1109 = vsel %vm418, %v1045, %v1077
        %v1110 = vsel %vm419, %v1046, %v1078
        %v1111 = vsel %vm419, %v1047, %v1079
        %v1112 = vsel %vm420, %v1048, %v1080
        %v1113 = vsel %vm420, %v1049, %v1081
        %v1114 = vsel %vm421, %v1050, %v1082
        %v1115 = vsel %vm421, %v1051, %v1083
        %v1116 = vsel %vm422, %v1052, %v1084
        %v1117 = vsel %vm422, %v1053, %v1085
        %v1118 = vsel %vm423, %v1054, %v1086
        %v1119 = vsel %vm423, %v1055, %v1087
        %v1120 = vsel %vm424, %v1056, %v1088
        %v1121 = vsel %vm424, %v1057, %v1089
        %v1122 = vsel %vm425, %v1058, %v1090
        %v1123 = vsel %vm425, %v1059, %v1091
        %v1124 = vsel %vm426, %v1060, %v1092
        %v1125 = vsel %vm426, %v1061, %v1093
        %v1126 = vsel %vm427, %v1062, %v1094
        %v1127 = vsel %vm427, %v1063, %v1095
        %v1128 = vsel %vm428, %v1064, %v1096
        %v1129 = vsel %vm428, %v1065, %v1097
        %v1130 = vsel %vm429, %v1066, %v1098
        %v1131 = vsel %vm429, %v1067, %v1099
        %v1132 = vsel %vm430, %v1068, %v1100
        %v1133 = vsel %vm430, %v1069, %v1101
        %v1134 = vsel %vm431, %v1070, %v1102
        %v1135 = vsel %vm431, %v1071, %v1103
        %v1136 = vadd.f32 %v1104, %v1105
        %1137 = vadd.xlane.f32.xlu0 %v1136
        %v1138 = vpop.xlane.xlu0 %1137
        %v1139 = vadd.f32 %v1106, %v1107
        %1140 = vadd.xlane.f32.xlu0 %v1139
        %v1141 = vpop.xlane.xlu0 %1140
        %v1142 = vadd.f32 %v1108, %v1109
        %1143 = vadd.xlane.f32.xlu0 %v1142
        %v1144 = vpop.xlane.xlu0 %1143
        %v1145 = vadd.f32 %v1110, %v1111
        %1146 = vadd.xlane.f32.xlu0 %v1145
        %v1147 = vpop.xlane.xlu0 %1146
        %v1148 = vadd.f32 %v1112, %v1113
        %1149 = vadd.xlane.f32.xlu0 %v1148
        %v1150 = vpop.xlane.xlu0 %1149
        %v1151 = vadd.f32 %v1114, %v1115
        %1152 = vadd.xlane.f32.xlu0 %v1151
        %v1153 = vpop.xlane.xlu0 %1152
        %v1154 = vadd.f32 %v1116, %v1117
        %1155 = vadd.xlane.f32.xlu0 %v1154
        %v1156 = vpop.xlane.xlu0 %1155
        %v1157 = vadd.f32 %v1118, %v1119
        %1158 = vadd.xlane.f32.xlu0 %v1157
        %v1159 = vpop.xlane.xlu0 %1158
        %v1160 = vadd.f32 %v1120, %v1121
        %1161 = vadd.xlane.f32.xlu0 %v1160
        %v1162 = vpop.xlane.xlu0 %1161
        %v1163 = vadd.f32 %v1122, %v1123
        %1164 = vadd.xlane.f32.xlu0 %v1163
        %v1165 = vpop.xlane.xlu0 %1164
        %v1166 = vadd.f32 %v1124, %v1125
        %1167 = vadd.xlane.f32.xlu0 %v1166
        %v1168 = vpop.xlane.xlu0 %1167
        %v1169 = vadd.f32 %v1126, %v1127
        %1170 = vadd.xlane.f32.xlu0 %v1169
        %v1171 = vpop.xlane.xlu0 %1170
        %v1172 = vadd.f32 %v1128, %v1129
        %1173 = vadd.xlane.f32.xlu0 %v1172
        %v1174 = vpop.xlane.xlu0 %1173
        %v1175 = vadd.f32 %v1130, %v1131
        %1176 = vadd.xlane.f32.xlu0 %v1175
        %v1177 = vpop.xlane.xlu0 %1176
        %v1178 = vadd.f32 %v1132, %v1133
        %1179 = vadd.xlane.f32.xlu0 %v1178
        %v1180 = vpop.xlane.xlu0 %1179
        %v1181 = vadd.f32 %v1134, %v1135
        %1182 = vadd.xlane.f32.xlu0 %v1181
        %v1183 = vpop.xlane.xlu0 %1182
        %v1184 = vmul.f32 %v1138, 0.00390625
        %v1185 = vmul.f32 %v1141, 0.00390625
        %v1186 = vmul.f32 %v1144, 0.00390625
        %v1187 = vmul.f32 %v1147, 0.00390625
        %v1188 = vmul.f32 %v1150, 0.00390625
        %v1189 = vmul.f32 %v1153, 0.00390625
        %v1190 = vmul.f32 %v1156, 0.00390625
        %v1191 = vmul.f32 %v1159, 0.00390625
        %v1192 = vmul.f32 %v1162, 0.00390625
        %v1193 = vmul.f32 %v1165, 0.00390625
        %v1194 = vmul.f32 %v1168, 0.00390625
        %v1195 = vmul.f32 %v1171, 0.00390625
        %v1196 = vmul.f32 %v1174, 0.00390625
        %v1197 = vmul.f32 %v1177, 0.00390625
        %v1198 = vmul.f32 %v1180, 0.00390625
        %v1199 = vmul.f32 %v1183, 0.00390625
        %v1200 = vld [vmem:[%s2] sm:$0xff]
        %v1201 = vld [vmem:[%s2 + $0x8] sm:$0xff]
        %v1202 = vld [vmem:[%s2 + $0x10] sm:$0xff]
        %v1203 = vld [vmem:[%s2 + $0x18] sm:$0xff]
        %v1204 = vld [vmem:[%s2 + $0x20] sm:$0xff]
        %v1205 = vld [vmem:[%s2 + $0x28] sm:$0xff]
        %v1206 = vld [vmem:[%s2 + $0x30] sm:$0xff]
        %v1207 = vld [vmem:[%s2 + $0x38] sm:$0xff]
        %v1208 = vld [vmem:[%s2 + $0x40] sm:$0xff]
        %v1209 = vld [vmem:[%s2 + $0x48] sm:$0xff]
        %v1210 = vld [vmem:[%s2 + $0x50] sm:$0xff]
        %v1211 = vld [vmem:[%s2 + $0x58] sm:$0xff]
        %v1212 = vld [vmem:[%s2 + $0x60] sm:$0xff]
        %v1213 = vld [vmem:[%s2 + $0x68] sm:$0xff]
        %v1214 = vld [vmem:[%s2 + $0x70] sm:$0xff]
        %v1215 = vld [vmem:[%s2 + $0x78] sm:$0xff]
        %v1216 = vmul.f32 %v1184, %v1200
        %v1217 = vmul.f32 %v1185, %v1201
        %v1218 = vmul.f32 %v1186, %v1202
        %v1219 = vmul.f32 %v1187, %v1203
        %v1220 = vmul.f32 %v1188, %v1204
        %v1221 = vmul.f32 %v1189, %v1205
        %v1222 = vmul.f32 %v1190, %v1206
        %v1223 = vmul.f32 %v1191, %v1207
        %v1224 = vmul.f32 %v1192, %v1208
        %v1225 = vmul.f32 %v1193, %v1209
        %v1226 = vmul.f32 %v1194, %v1210
        %v1227 = vmul.f32 %v1195, %v1211
        %v1228 = vmul.f32 %v1196, %v1212
        %v1229 = vmul.f32 %v1197, %v1213
        %v1230 = vmul.f32 %v1198, %v1214
        %v1231 = vmul.f32 %v1199, %v1215
        %v1232 = vadd.f32 %v1216, %v1217
        %v1233 = vadd.f32 %v1232, %v1218
        %v1234 = vadd.f32 %v1233, %v1219
        %v1235 = vadd.f32 %v1234, %v1220
        %v1236 = vadd.f32 %v1235, %v1221
        %v1237 = vadd.f32 %v1236, %v1222
        %v1238 = vadd.f32 %v1237, %v1223
        %v1239 = vadd.f32 %v1238, %v1224
        %v1240 = vadd.f32 %v1239, %v1225
        %v1241 = vadd.f32 %v1240, %v1226
        %v1242 = vadd.f32 %v1241, %v1227
        %v1243 = vadd.f32 %v1242, %v1228
        %v1244 = vadd.f32 %v1243, %v1229
        %v1245 = vadd.f32 %v1244, %v1230
        %v1246 = vadd.f32 %v1245, %v1231
        %v1247 = vrot.slane %v1246, 4
        %v1248 = vadd.f32 %v1246, %v1247
        %v1249 = vrot.slane %v1248, 2
        %v1250 = vadd.f32 %v1248, %v1249
        %v1251 = vrot.slane %v1250, 1
        %v1252 = vadd.f32 %v1250, %v1251
        %v1253 = vld [vmem:[%s3] sm:$0x1]
        %v1254 = vadd.f32 %v1252, %v1253
        %1255 = vst [vmem:[%s189] sm:$0x1] %v1254
        %s1256 = sand.u32 %s115, 1
        %s1257 = scalar_lea.sflag [#allocation3], %s1256
        %s1258 = sand.u32 %s115, 1
        %s1259 = scalar_lea.vmem [#allocation2], %s1258
        // Predicated region
        $region37: #{ensemble_forward.1} parent=35 // pred_check
          %p1260 = pneg %p125
        $region38: #{ensemble_forward.1} parent=35 // pred_check_branch
          %1262 = sbr.rel (%p1260) target = $region40
        $region39: #{ensemble_forward.1} parent=35 // pred_region
          %1264 = vsyncadd %s1257, 0
          %s1265 = scalar_lea.hbm %s4, %s18
          %s1267 = sshll.u32 %s1259, 4
          %s1268 = int_to_ptr.vmem [resolvable:$true] %s1267
          %s1269 = sshll.u32 %s1265, 4
          %s1270 = int_to_ptr.hbm [resolvable:$true] %s1269
          %1272 = dma.vmem_to_hbm [thread:$0]  %s1268, 16, %s1270, %s1257
        $region40: #{ensemble_forward.1} parent=35 // pred_fallthru
          _
      $region36: #{ensemble_forward.1} parent=5 // pred_fallthru
        _
      %p1273 = scmp.le.s32.totalorder 2, %s13
      // Predicated region
      $region41: #{ensemble_forward.1} parent=5 // pred_check
        %p1274 = pneg %p1273
      $region42: #{ensemble_forward.1} parent=5 // pred_check_branch
        %1276 = sbr.rel (%p1274) target = $region44
      $region43: #{ensemble_forward.1} parent=5 // pred_region
        %s1277 = ssub.s32 %s13, 2
        // Predicated region
        $region45: #{ensemble_forward.1} parent=43 // pred_check
          %p1278 = pneg %p131
        $region46: #{ensemble_forward.1} parent=43 // pred_check_branch
          %1280 = sbr.rel (%p1278) target = $region48
        $region47: #{ensemble_forward.1} parent=43 // pred_region
          %s1281 = sand.u32 %s116, 1
          %s1282 = scalar_lea.sflag [#allocation3], %s1281
          %s1283 = sand.u32 %s116, 1
          %s1284 = scalar_lea.vmem [#allocation2], %s1283
          %1286 = dma.done %s1282, 16
        $region48: #{ensemble_forward.1} parent=43 // pred_fallthru
          _
      $region44: #{ensemble_forward.1} parent=5 // pred_fallthru
        _
    $region6: #{ensemble_forward.1} parent=1 // loop_footer
      %s17 = sadd.s32 1, %s13
    $region7: #{ensemble_forward.1} parent=1 // loop_footer_branch
      %12 = sbr.rel target = $region3
    $region8: #{ensemble_forward.1} parent=1 // loop_exit
      _
    %1287 = vsyncpa [#allocation3], 1
    %s1288 = scalar_lea.sflag [#allocation3], 1
    %1289 = vsyncpa %s1288, 1

</llo_original>
